<compile_context>
chip_gen: v7x
topology: tpu7x:2x2x1
jax: 0.10.0
libtpu: 0.0.40
codegen_flags: <defaults>
</compile_context>

<pallas_src>
import functools

import jax
import jax.numpy as jnp
import numpy as np
from jax.experimental import pallas as pl
from jax.experimental.pallas import tpu as pltpu

# Precision policy: HIGHEST for the hoisted projection AND the reference so kernel vs
# reference numerics stay consistent; the in-kernel f32 matmul uses Mosaic's exact-f32
# lowering.
# TODO(synk): on v6e/v7x, cast W_ih/W_hh/xw to bf16 (keep f32 accumulation + f32 h/c)
# and drop HIGHEST for ~3x on the projection matmul and half the weight VMEM.
_PROJ_PRECISION = jax.lax.Precision.HIGHEST


# ----------------------------- Pallas kernel --------------------------------
def _lstm_fused_kernel(xw_ref, whh_ref, h0_ref, c0_ref, out_ref, hn_ref, cn_ref):
  """Direction-fused LSTM over one time chunk. Grid axis 0 = time chunk ("arbitrary").

  Fused column layout (DH = num_dirs * H, gate-major):
    gates = [ i_d0..i_dD | f_d0..f_dD | g_d0..g_dD | o_d0..o_dD ]   (4*DH lanes)
    h / c = [ h_d0 .. h_dD ]                                        (DH lanes)

  xw_ref : (T_chunk, B, 4*DH) precomputed x_t @ W_ih^T + (b_ih+b_hh), fused layout;
                              direction d>0 inputs are already time-reversed.
  whh_ref: (DH, 4*DH)         block-diagonal recurrent weights (resident all chunks)
  h0_ref : (B, DH)            initial hidden state (used on chunk 0 only)
  c0_ref : (B, DH)            initial cell state
  out_ref: (B, T_chunk*DH)    per-step hidden states, lane-dense, one store per chunk
  hn_ref : (B, DH)            running / final hidden state (resident accumulator)
  cn_ref : (B, DH)            running / final cell state
  """
  t_chunk = xw_ref.shape[0]
  DH = hn_ref.shape[-1]

  # Chunk 0: seed the resident carry (hn/cn stay in VMEM across the whole grid).
  @pl.when(pl.program_id(0) == 0)
  def _():
    hn_ref[...] = h0_ref[...]
    cn_ref[...] = c0_ref[...]

  whh = whh_ref[...]                          # (DH, 4*DH), VMEM-resident
  h = hn_ref[...].astype(jnp.float32)
  c = cn_ref[...].astype(jnp.float32)

  # Static Python loop == capped unroll; the grid axis handles long sequences.
  hs = []
  for t in range(t_chunk):
    # Serial critical path: one (B, DH) @ (DH, 4*DH) MXU matmul + precomputed xw[t].
    gates = xw_ref[t] + jnp.dot(h, whh, preferred_element_type=jnp.float32)
    sig = jax.nn.sigmoid(gates)               # single EUP pass over all 4*DH lanes
    i = sig[:, 0:DH]
    f = sig[:, DH:2 * DH]
    g = jnp.tanh(gates[:, 2 * DH:3 * DH])     # tanh only on the contiguous g lanes
    o = sig[:, 3 * DH:4 * DH]
    c = f * c + i * g
    h = o * jnp.tanh(c)
    hs.append(h)

  # Lane-dense chunk store: last dim = t_chunk*DH (multiple of 128) -> unmasked store,
  # one dense HBM writeback per chunk.
  out_ref[...] = jnp.concatenate(hs, axis=-1).astype(out_ref.dtype)
  hn_ref[...] = h.astype(hn_ref.dtype)
  cn_ref[...] = c.astype(cn_ref.dtype)


def fused_lstm_layer(xw_fused, whh_fused, h0_fused, c0_fused, *, t_chunk):
  """One direction-fused LSTM layer as a single pallas_call, grid over time chunks.

  xw_fused : (T, B, 4*DH)   whh_fused : (DH, 4*DH)
  h0_fused : (B, DH)        c0_fused  : (B, DH)
  returns out (B, T*DH), hn (B, DH), cn (B, DH)
  """
  T, B, G = xw_fused.shape                    # G = 4 * D * H
  DH = h0_fused.shape[-1]
  assert T % t_chunk == 0, "toy wrapper requires T % t_chunk == 0"
  n_chunks = T // t_chunk

  itemsize = np.dtype(xw_fused.dtype).itemsize
  block_bytes = itemsize * (2 * t_chunk * B * G      # double-buffered xw chunks
                            + 2 * B * t_chunk * DH   # double-buffered out chunks
                            + DH * G                 # resident W_hh
                            + 6 * B * DH)            # h0/c0/hn/cn + slack
  # Explicit scoped-VMEM budget with headroom; stays under every generation's default
  # (16 MiB v5e / 32 MiB v6e,v7x) and well under v7x's 64 MiB/TC physical VMEM.
  vmem_limit = int(min(32 * 1024 * 1024, max(2 * 1024 * 1024, 8 * block_bytes)))

  return pl.pallas_call(
      _lstm_fused_kernel,
      out_shape=(jax.ShapeDtypeStruct((B, T * DH), xw_fused.dtype),
                 jax.ShapeDtypeStruct((B, DH), xw_fused.dtype),
                 jax.ShapeDtypeStruct((B, DH), xw_fused.dtype)),
      grid_spec=pltpu.PrefetchScalarGridSpec(
          num_scalar_prefetch=0,
          grid=(n_chunks,),
          in_specs=[
              pl.BlockSpec((t_chunk, B, G), lambda c: (c, 0, 0)),  # xw time chunk
              pl.BlockSpec((DH, G), lambda c: (0, 0)),             # fused W_hh (resident)
              pl.BlockSpec((B, DH), lambda c: (0, 0)),             # h0
              pl.BlockSpec((B, DH), lambda c: (0, 0)),             # c0
          ],
          out_specs=(pl.BlockSpec((B, t_chunk * DH), lambda c: (0, c)),  # out chunk
                     pl.BlockSpec((B, DH), lambda c: (0, 0)),            # hn (resident)
                     pl.BlockSpec((B, DH), lambda c: (0, 0)))),          # cn (resident)
      # Time chunks carry state -> sequential ("arbitrary") grid axis.
      compiler_params=pltpu.CompilerParams(
          dimension_semantics=("arbitrary",),
          vmem_limit_bytes=vmem_limit),
  )(xw_fused, whh_fused, h0_fused, c0_fused)
  # TODO(synk): at production scale, stack independent sequences along B (up to ~8 f32
  # sublanes / MXU rows) and shard batch across v7x's two TensorCores.


# --------------------------- EncoderCell wrapper -----------------------------
def init_encoder_params(key, input_size, hidden_size, nlayers, bidirection):
  """Deterministic init matching nn.LSTM shapes: U(-1/sqrt(H), 1/sqrt(H)).

  Per layer returns direction-stacked, pre-transposed tensors:
    W_ih^T: (D, in_sz, 4H), W_hh^T: (D, H, 4H), bias (b_ih + b_hh): (D, 4H)
  """
  num_dirs = 2 if bidirection else 1
  k = 1.0 / np.sqrt(hidden_size)
  params = []
  for l in range(nlayers):
    in_sz = input_size if l == 0 else num_dirs * hidden_size
    wih_list, whh_list, b_list = [], [], []
    for _ in range(num_dirs):
      key, k1, k2, k3, k4 = jax.random.split(key, 5)
      w_ih = jax.random.uniform(k1, (4 * hidden_size, in_sz), jnp.float32, -k, k)
      w_hh = jax.random.uniform(k2, (4 * hidden_size, hidden_size), jnp.float32, -k, k)
      b_ih = jax.random.uniform(k3, (4 * hidden_size,), jnp.float32, -k, k)
      b_hh = jax.random.uniform(k4, (4 * hidden_size,), jnp.float32, -k, k)
      wih_list.append(w_ih.T)
      whh_list.append(w_hh.T)
      b_list.append(b_ih + b_hh)
    params.append((jnp.stack(wih_list), jnp.stack(whh_list), jnp.stack(b_list)))
  return params


def encoder_cell_forward(params, x_bti, hidden, *, bidirection, t_chunk=4):
  """Mirrors EncoderCell.forward: output, (h_n, c_n) = LSTM(input, hidden)."""
  h0_all, c0_all = hidden
  D = 2 if bidirection else 1
  B = x_bti.shape[0]

  layer_in = jnp.transpose(x_bti, (1, 0, 2))            # (T, B, I), time-major
  T = layer_in.shape[0]
  hn_list, cn_list = [], []
  for l, (wih_t, whh_t, b) in enumerate(params):
    H = whh_t.shape[1]
    DH = D * H

    # Per-direction time-major inputs: dir 0 forward, dir 1 time-reversed.
    xs = [layer_in]
    if D == 2:
      xs.append(jnp.flip(layer_in, axis=0))
    x_dirs = jnp.stack(xs, axis=0)                      # (D, T, B, in_sz)

    # Hoisted input projection (+ biases) as one batched XLA matmul; only
    # h_prev @ W_hh^T remains on the serial in-kernel path.
    xw = jnp.einsum('dtbi,dig->dtbg', x_dirs, wih_t,
                    precision=_PROJ_PRECISION) + b[:, None, None, :]
    # Fuse directions gate-major along lanes: columns [i_d0 i_d1 | f.. | g.. | o..].
    xw_f = jnp.transpose(xw.reshape(D, T, B, 4, H),
                         (1, 2, 3, 0, 4)).reshape(T, B, 4 * DH)

    # Block-diagonal recurrent weights in the same fused layout: (DH, 4*DH).
    whh_f = jnp.zeros((DH, 4, DH), whh_t.dtype)
    for d in range(D):
      whh_f = whh_f.at[d * H:(d + 1) * H, :, d * H:(d + 1) * H].set(
          whh_t[d].reshape(H, 4, H))
    whh_f = whh_f.reshape(DH, 4 * DH)

    # Fused initial state: (B, DH) = [h_d0, h_d1].
    h0 = jnp.concatenate([h0_all[l * D + d] for d in range(D)], axis=-1)
    c0 = jnp.concatenate([c0_all[l * D + d] for d in range(D)], axis=-1)

    out_flat, hn_f, cn_f = fused_lstm_layer(xw_f, whh_f, h0, c0,
                                            t_chunk=min(t_chunk, T))
    out_btd = out_flat.reshape(B, T, DH)                # (B, T, DH), kernel-time order

    dir_outs = [out_btd[:, :, :H]]
    if D == 2:
      dir_outs.append(jnp.flip(out_btd[:, :, H:], axis=1))   # restore original time order
    out_bt = jnp.concatenate(dir_outs, axis=-1)         # (B, T, D*H)

    for d in range(D):
      hn_list.append(hn_f[:, d * H:(d + 1) * H])
      cn_list.append(cn_f[:, d * H:(d + 1) * H])

    layer_in = jnp.transpose(out_bt, (1, 0, 2))         # (T, B, D*H) for next layer
    # TODO(synk): inter-layer dropout is skipped (config.dropout assumed 0.0).

  output = jnp.transpose(layer_in, (1, 0, 2))           # back to (B, T, D*H), batch_first
  return output, (jnp.stack(hn_list), jnp.stack(cn_list))


# ------------------------- pure-JAX reference check --------------------------
def _ref_dir(x_tbi, wih_t, whh_t, b, h0, c0):
  T = x_tbi.shape[0]
  H = h0.shape[-1]
  h, c = h0, c0
  outs = []
  hi = _PROJ_PRECISION
  for t in range(T):
    gates = (jnp.dot(x_tbi[t], wih_t, precision=hi)
             + jnp.dot(h, whh_t, precision=hi) + b)
    i = jax.nn.sigmoid(gates[:, :H])
    f = jax.nn.sigmoid(gates[:, H:2 * H])
    g = jnp.tanh(gates[:, 2 * H:3 * H])
    o = jax.nn.sigmoid(gates[:, 3 * H:])
    c = f * c + i * g
    h = o * jnp.tanh(c)
    outs.append(h)
  return jnp.stack(outs), h, c


def _ref_forward(params, x_bti, hidden, *, bidirection):
  h0_all, c0_all = hidden
  num_dirs = 2 if bidirection else 1
  layer_in = jnp.transpose(x_bti, (1, 0, 2))
  hn_list, cn_list = [], []
  for l, (wih_t, whh_t, b) in enumerate(params):
    dir_outs = []
    for d in range(num_dirs):
      idx = l * num_dirs + d
      xin = layer_in if d == 0 else jnp.flip(layer_in, axis=0)
      out, hn, cn = _ref_dir(xin, wih_t[d], whh_t[d], b[d],
                             h0_all[idx], c0_all[idx])
      if d == 1:
        out = jnp.flip(out, axis=0)
      dir_outs.append(out)
      hn_list.append(hn)
      cn_list.append(cn)
    layer_in = jnp.concatenate(dir_outs, axis=-1)
  return (jnp.transpose(layer_in, (1, 0, 2)),
          (jnp.stack(hn_list), jnp.stack(cn_list)))


# ---------------------------------- main -------------------------------------
if __name__ == "__main__":
  B, T, I, H = 2, 8, 32, 32
  NLAYERS, BIDIR = 1, True
  T_CHUNK = 4                                  # 2 chunks -> exercises the carried state
  num_dirs = 2 if BIDIR else 1

  key = jax.random.PRNGKey(0)
  key, kx = jax.random.split(key)
  x = jax.random.normal(kx, (B, T, I), jnp.float32)        # batch_first input

  params = init_encoder_params(key, I, H, NLAYERS, BIDIR)

  # EncoderCell.init_weights(bsz): zero hidden state (h0, c0).
  h0 = jnp.zeros((NLAYERS * num_dirs, B, H), jnp.float32)
  c0 = jnp.zeros((NLAYERS * num_dirs, B, H), jnp.float32)

  fwd = jax.jit(functools.partial(encoder_cell_forward, bidirection=BIDIR,
                                  t_chunk=T_CHUNK))
  output, (h_n, c_n) = jax.block_until_ready(fwd(params, x, (h0, c0)))

  # Sanity check against a pure-JAX reference of the same LSTM.
  ref_out, (ref_hn, ref_cn) = _ref_forward(params, x, (h0, c0), bidirection=BIDIR)
  np.testing.assert_allclose(np.asarray(output), np.asarray(ref_out), rtol=5e-5, atol=5e-5)
  np.testing.assert_allclose(np.asarray(h_n), np.asarray(ref_hn), rtol=5e-5, atol=5e-5)
  np.testing.assert_allclose(np.asarray(c_n), np.asarray(ref_cn), rtol=5e-5, atol=5e-5)

  assert output.shape == (B, T, num_dirs * H)
  assert h_n.shape == (NLAYERS * num_dirs, B, H)
  assert c_n.shape == (NLAYERS * num_dirs, B, H)
  print("KERNEL_OK")
</pallas_src>

<mosaic_0001>
module attributes {stable_mosaic.version = 11 : i64} {
  func.func @_lstm_fused_kernel(%arg0: i32, %arg1: memref<4x2x256xf32, #tpu.memory_space<vmem>>, %arg2: memref<64x256xf32, #tpu.memory_space<vmem>>, %arg3: memref<2x64xf32, #tpu.memory_space<vmem>>, %arg4: memref<2x64xf32, #tpu.memory_space<vmem>>, %arg5: memref<2x256xf32, #tpu.memory_space<vmem>>, %arg6: memref<2x64xf32, #tpu.memory_space<vmem>>, %arg7: memref<2x64xf32, #tpu.memory_space<vmem>>) attributes {dimension_semantics = [#tpu.dimension_semantics<arbitrary>], iteration_bounds = array<i64: 2>, scalar_prefetch = 0 : i64, scratch_operands = 0 : i64, tpu.core_type = #tpu.core_type<tc>, window_params = [{transform_indices = @transform_0, window_bounds = array<i64: 4, 2, 256>}, {pipeline_mode = #tpu.pipeline_mode<synchronous>, transform_indices = @transform_1, window_bounds = array<i64: 64, 256>}, {pipeline_mode = #tpu.pipeline_mode<synchronous>, transform_indices = @transform_2, window_bounds = array<i64: 2, 64>}, {pipeline_mode = #tpu.pipeline_mode<synchronous>, transform_indices = @transform_3, window_bounds = array<i64: 2, 64>}, {transform_indices = @transform_4, window_bounds = array<i64: 2, 256>}, {pipeline_mode = #tpu.pipeline_mode<synchronous>, transform_indices = @transform_5, window_bounds = array<i64: 2, 64>}, {pipeline_mode = #tpu.pipeline_mode<synchronous>, transform_indices = @transform_6, window_bounds = array<i64: 2, 64>}]} {
    %c0_i32 = arith.constant 0 : i32
    %0 = arith.cmpi eq, %arg0, %c0_i32 : i32
    %1 = arith.extui %0 : i1 to i32
    %c0_i32_0 = arith.constant 0 : i32
    %2 = arith.cmpi ne, %1, %c0_i32_0 : i32
    scf.if %2 {
      %c0_28 = arith.constant 0 : index
      %c0_29 = arith.constant 0 : index
      %86 = vector.load %arg3[%c0_28, %c0_29] : memref<2x64xf32, #tpu.memory_space<vmem>>, vector<2x64xf32>
      %c0_30 = arith.constant 0 : index
      %c0_31 = arith.constant 0 : index
      %87 = vector.load %arg6[%c0_30, %c0_31] : memref<2x64xf32, #tpu.memory_space<vmem>>, vector<2x64xf32>
      tpu.vector_store %arg6[%c0_30, %c0_31], %86 {strides = array<i32>} : memref<2x64xf32, #tpu.memory_space<vmem>>, vector<2x64xf32>,
      %c0_32 = arith.constant 0 : index
      %c0_33 = arith.constant 0 : index
      %88 = vector.load %arg4[%c0_32, %c0_33] : memref<2x64xf32, #tpu.memory_space<vmem>>, vector<2x64xf32>
      %c0_34 = arith.constant 0 : index
      %c0_35 = arith.constant 0 : index
      %89 = vector.load %arg7[%c0_34, %c0_35] : memref<2x64xf32, #tpu.memory_space<vmem>>, vector<2x64xf32>
      tpu.vector_store %arg7[%c0_34, %c0_35], %88 {strides = array<i32>} : memref<2x64xf32, #tpu.memory_space<vmem>>, vector<2x64xf32>,
    } else {
    }
    %c0 = arith.constant 0 : index
    %c0_1 = arith.constant 0 : index
    %3 = vector.load %arg2[%c0, %c0_1] : memref<64x256xf32, #tpu.memory_space<vmem>>, vector<64x256xf32>
    %c0_2 = arith.constant 0 : index
    %c0_3 = arith.constant 0 : index
    %4 = vector.load %arg6[%c0_2, %c0_3] : memref<2x64xf32, #tpu.memory_space<vmem>>, vector<2x64xf32>
    %c0_4 = arith.constant 0 : index
    %c0_5 = arith.constant 0 : index
    %5 = vector.load %arg7[%c0_4, %c0_5] : memref<2x64xf32, #tpu.memory_space<vmem>>, vector<2x64xf32>
    %c0_6 = arith.constant 0 : index
    %c0_7 = arith.constant 0 : index
    %c0_8 = arith.constant 0 : index
    %6 = vector.load %arg1[%c0_6, %c0_7, %c0_8] : memref<4x2x256xf32, #tpu.memory_space<vmem>>, vector<1x2x256xf32>
    %7 = vector.shape_cast %6 : vector<1x2x256xf32> to vector<2x256xf32>
    %cst = arith.constant dense<0.000000e+00> : vector<2x256xf32>
    %8 = tpu.matmul %4, %3, %cst {dimension_numbers = #tpu.dot_dimension_numbers<[1], [0], [0], [1], [0, 0, 1, 1], [], []>} : vector<2x64xf32>, vector<64x256xf32>, vector<2x256xf32> -> vector<2x256xf32>
    %9 = arith.addf %7, %8 : vector<2x256xf32>
    %10 = arith.negf %9 : vector<2x256xf32>
    %11 = math.exp %10 : vector<2x256xf32>
    %cst_9 = arith.constant 1.000000e+00 : f32
    %12 = vector.broadcast %cst_9 : f32 to vector<2x256xf32>
    %13 = arith.addf %12, %11 : vector<2x256xf32>
    %14 = arith.divf %12, %13 : vector<2x256xf32>
    %15 = vector.extract_strided_slice %14 {offsets = [0, 0], sizes = [2, 64], strides = [1, 1]} : vector<2x256xf32> to vector<2x64xf32>
    %16 = vector.extract_strided_slice %14 {offsets = [0, 64], sizes = [2, 64], strides = [1, 1]} : vector<2x256xf32> to vector<2x64xf32>
    %17 = vector.extract_strided_slice %9 {offsets = [0, 128], sizes = [2, 64], strides = [1, 1]} : vector<2x256xf32> to vector<2x64xf32>
    %18 = math.tanh %17 : vector<2x64xf32>
    %19 = vector.extract_strided_slice %14 {offsets = [0, 192], sizes = [2, 64], strides = [1, 1]} : vector<2x256xf32> to vector<2x64xf32>
    %20 = arith.mulf %16, %5 : vector<2x64xf32>
    %21 = arith.mulf %15, %18 : vector<2x64xf32>
    %22 = arith.addf %20, %21 : vector<2x64xf32>
    %23 = math.tanh %22 : vector<2x64xf32>
    %24 = arith.mulf %19, %23 : vector<2x64xf32>
    %c1 = arith.constant 1 : index
    %c0_10 = arith.constant 0 : index
    %c0_11 = arith.constant 0 : index
    %25 = vector.load %arg1[%c1, %c0_10, %c0_11] : memref<4x2x256xf32, #tpu.memory_space<vmem>>, vector<1x2x256xf32>
    %26 = vector.shape_cast %25 : vector<1x2x256xf32> to vector<2x256xf32>
    %cst_12 = arith.constant dense<0.000000e+00> : vector<2x256xf32>
    %27 = tpu.matmul %24, %3, %cst_12 {dimension_numbers = #tpu.dot_dimension_numbers<[1], [0], [0], [1], [0, 0, 1, 1], [], []>} : vector<2x64xf32>, vector<64x256xf32>, vector<2x256xf32> -> vector<2x256xf32>
    %28 = arith.addf %26, %27 : vector<2x256xf32>
    %29 = arith.negf %28 : vector<2x256xf32>
    %30 = math.exp %29 : vector<2x256xf32>
    %cst_13 = arith.constant 1.000000e+00 : f32
    %31 = vector.broadcast %cst_13 : f32 to vector<2x256xf32>
    %32 = arith.addf %31, %30 : vector<2x256xf32>
    %33 = arith.divf %31, %32 : vector<2x256xf32>
    %34 = vector.extract_strided_slice %33 {offsets = [0, 0], sizes = [2, 64], strides = [1, 1]} : vector<2x256xf32> to vector<2x64xf32>
    %35 = vector.extract_strided_slice %33 {offsets = [0, 64], sizes = [2, 64], strides = [1, 1]} : vector<2x256xf32> to vector<2x64xf32>
    %36 = vector.extract_strided_slice %28 {offsets = [0, 128], sizes = [2, 64], strides = [1, 1]} : vector<2x256xf32> to vector<2x64xf32>
    %37 = math.tanh %36 : vector<2x64xf32>
    %38 = vector.extract_strided_slice %33 {offsets = [0, 192], sizes = [2, 64], strides = [1, 1]} : vector<2x256xf32> to vector<2x64xf32>
    %39 = arith.mulf %35, %22 : vector<2x64xf32>
    %40 = arith.mulf %34, %37 : vector<2x64xf32>
    %41 = arith.addf %39, %40 : vector<2x64xf32>
    %42 = math.tanh %41 : vector<2x64xf32>
    %43 = arith.mulf %38, %42 : vector<2x64xf32>
    %c2 = arith.constant 2 : index
    %c0_14 = arith.constant 0 : index
    %c0_15 = arith.constant 0 : index
    %44 = vector.load %arg1[%c2, %c0_14, %c0_15] : memref<4x2x256xf32, #tpu.memory_space<vmem>>, vector<1x2x256xf32>
    %45 = vector.shape_cast %44 : vector<1x2x256xf32> to vector<2x256xf32>
    %cst_16 = arith.constant dense<0.000000e+00> : vector<2x256xf32>
    %46 = tpu.matmul %43, %3, %cst_16 {dimension_numbers = #tpu.dot_dimension_numbers<[1], [0], [0], [1], [0, 0, 1, 1], [], []>} : vector<2x64xf32>, vector<64x256xf32>, vector<2x256xf32> -> vector<2x256xf32>
    %47 = arith.addf %45, %46 : vector<2x256xf32>
    %48 = arith.negf %47 : vector<2x256xf32>
    %49 = math.exp %48 : vector<2x256xf32>
    %cst_17 = arith.constant 1.000000e+00 : f32
    %50 = vector.broadcast %cst_17 : f32 to vector<2x256xf32>
    %51 = arith.addf %50, %49 : vector<2x256xf32>
    %52 = arith.divf %50, %51 : vector<2x256xf32>
    %53 = vector.extract_strided_slice %52 {offsets = [0, 0], sizes = [2, 64], strides = [1, 1]} : vector<2x256xf32> to vector<2x64xf32>
    %54 = vector.extract_strided_slice %52 {offsets = [0, 64], sizes = [2, 64], strides = [1, 1]} : vector<2x256xf32> to vector<2x64xf32>
    %55 = vector.extract_strided_slice %47 {offsets = [0, 128], sizes = [2, 64], strides = [1, 1]} : vector<2x256xf32> to vector<2x64xf32>
    %56 = math.tanh %55 : vector<2x64xf32>
    %57 = vector.extract_strided_slice %52 {offsets = [0, 192], sizes = [2, 64], strides = [1, 1]} : vector<2x256xf32> to vector<2x64xf32>
    %58 = arith.mulf %54, %41 : vector<2x64xf32>
    %59 = arith.mulf %53, %56 : vector<2x64xf32>
    %60 = arith.addf %58, %59 : vector<2x64xf32>
    %61 = math.tanh %60 : vector<2x64xf32>
    %62 = arith.mulf %57, %61 : vector<2x64xf32>
    %c3 = arith.constant 3 : index
    %c0_18 = arith.constant 0 : index
    %c0_19 = arith.constant 0 : index
    %63 = vector.load %arg1[%c3, %c0_18, %c0_19] : memref<4x2x256xf32, #tpu.memory_space<vmem>>, vector<1x2x256xf32>
    %64 = vector.shape_cast %63 : vector<1x2x256xf32> to vector<2x256xf32>
    %cst_20 = arith.constant dense<0.000000e+00> : vector<2x256xf32>
    %65 = tpu.matmul %62, %3, %cst_20 {dimension_numbers = #tpu.dot_dimension_numbers<[1], [0], [0], [1], [0, 0, 1, 1], [], []>} : vector<2x64xf32>, vector<64x256xf32>, vector<2x256xf32> -> vector<2x256xf32>
    %66 = arith.addf %64, %65 : vector<2x256xf32>
    %67 = arith.negf %66 : vector<2x256xf32>
    %68 = math.exp %67 : vector<2x256xf32>
    %cst_21 = arith.constant 1.000000e+00 : f32
    %69 = vector.broadcast %cst_21 : f32 to vector<2x256xf32>
    %70 = arith.addf %69, %68 : vector<2x256xf32>
    %71 = arith.divf %69, %70 : vector<2x256xf32>
    %72 = vector.extract_strided_slice %71 {offsets = [0, 0], sizes = [2, 64], strides = [1, 1]} : vector<2x256xf32> to vector<2x64xf32>
    %73 = vector.extract_strided_slice %71 {offsets = [0, 64], sizes = [2, 64], strides = [1, 1]} : vector<2x256xf32> to vector<2x64xf32>
    %74 = vector.extract_strided_slice %66 {offsets = [0, 128], sizes = [2, 64], strides = [1, 1]} : vector<2x256xf32> to vector<2x64xf32>
    %75 = math.tanh %74 : vector<2x64xf32>
    %76 = vector.extract_strided_slice %71 {offsets = [0, 192], sizes = [2, 64], strides = [1, 1]} : vector<2x256xf32> to vector<2x64xf32>
    %77 = arith.mulf %73, %60 : vector<2x64xf32>
    %78 = arith.mulf %72, %75 : vector<2x64xf32>
    %79 = arith.addf %77, %78 : vector<2x64xf32>
    %80 = math.tanh %79 : vector<2x64xf32>
    %81 = arith.mulf %76, %80 : vector<2x64xf32>
    %82 = tpu.concatenate %24, %43, %62, %81 in 1 : vector<2x64xf32>, vector<2x64xf32>, vector<2x64xf32>, vector<2x64xf32> -> vector<2x256xf32>
    %c0_22 = arith.constant 0 : index
    %c0_23 = arith.constant 0 : index
    %83 = vector.load %arg5[%c0_22, %c0_23] : memref<2x256xf32, #tpu.memory_space<vmem>>, vector<2x256xf32>
    tpu.vector_store %arg5[%c0_22, %c0_23], %82 {strides = array<i32>} : memref<2x256xf32, #tpu.memory_space<vmem>>, vector<2x256xf32>,
    %c0_24 = arith.constant 0 : index
    %c0_25 = arith.constant 0 : index
    %84 = vector.load %arg6[%c0_24, %c0_25] : memref<2x64xf32, #tpu.memory_space<vmem>>, vector<2x64xf32>
    tpu.vector_store %arg6[%c0_24, %c0_25], %81 {strides = array<i32>} : memref<2x64xf32, #tpu.memory_space<vmem>>, vector<2x64xf32>,
    %c0_26 = arith.constant 0 : index
    %c0_27 = arith.constant 0 : index
    %85 = vector.load %arg7[%c0_26, %c0_27] : memref<2x64xf32, #tpu.memory_space<vmem>>, vector<2x64xf32>
    tpu.vector_store %arg7[%c0_26, %c0_27], %79 {strides = array<i32>} : memref<2x64xf32, #tpu.memory_space<vmem>>, vector<2x64xf32>,
    return
  }
  func.func @transform_0(%arg0: i32) -> (i32, i32, i32) {
    %c0_i32 = arith.constant 0 : i32
    %c0_i32_0 = arith.constant 0 : i32
    %c0_i32_1 = arith.constant 0 : i32
    return %arg0, %c0_i32, %c0_i32_0 : i32, i32, i32
  }
  func.func @transform_1(%arg0: i32) -> (i32, i32) {
    %c0_i32 = arith.constant 0 : i32
    %c0_i32_0 = arith.constant 0 : i32
    %c0_i32_1 = arith.constant 0 : i32
    return %c0_i32, %c0_i32_0 : i32, i32
  }
  func.func @transform_2(%arg0: i32) -> (i32, i32) {
    %c0_i32 = arith.constant 0 : i32
    %c0_i32_0 = arith.constant 0 : i32
    %c0_i32_1 = arith.constant 0 : i32
    return %c0_i32, %c0_i32_0 : i32, i32
  }
  func.func @transform_3(%arg0: i32) -> (i32, i32) {
    %c0_i32 = arith.constant 0 : i32
    %c0_i32_0 = arith.constant 0 : i32
    %c0_i32_1 = arith.constant 0 : i32
    return %c0_i32, %c0_i32_0 : i32, i32
  }
  func.func @transform_4(%arg0: i32) -> (i32, i32) {
    %c0_i32 = arith.constant 0 : i32
    %c0_i32_0 = arith.constant 0 : i32
    return %c0_i32, %arg0 : i32, i32
  }
  func.func @transform_5(%arg0: i32) -> (i32, i32) {
    %c0_i32 = arith.constant 0 : i32
    %c0_i32_0 = arith.constant 0 : i32
    %c0_i32_1 = arith.constant 0 : i32
    return %c0_i32, %c0_i32_0 : i32, i32
  }
  func.func @transform_6(%arg0: i32) -> (i32, i32) {
    %c0_i32 = arith.constant 0 : i32
    %c0_i32_0 = arith.constant 0 : i32
    %c0_i32_1 = arith.constant 0 : i32
    return %c0_i32, %c0_i32_0 : i32, i32
  }
}

</mosaic_0001>

<llo_original>
// kernel: encoder_cell_forward.1
$region0: #{encoder_cell_forward.1}
  #allocation0 [shape = 'u32[]', space=smem, size = 0x4, offset = 0x4, fixed_abs, tag = 'smem constant byte address 0x4 - core index']
  #allocation1 [shape = 'u32[144,128]{1,0:T(1,128)}', space=vmem, size = 0x12000, scoped, tag = 'internal scratch']
  %s0 = inlined_call_operand.vmem [shape: f32[8,2,256], index: 0, kind: input, shape index: {}]
  %s1 = inlined_call_operand.vmem [shape: f32[64,256], index: 1, kind: input, shape index: {}]
  %s2 = inlined_call_operand.vmem [shape: f32[2,64], index: 2, kind: input, shape index: {}]
  %s3 = inlined_call_operand.vmem [shape: f32[2,64], index: 3, kind: input, shape index: {}]
  %s4 = inlined_call_operand.vmem [shape: f32[2,512], index: 4, kind: output, shape index: {0}]
  %s5 = inlined_call_operand.vmem [shape: f32[2,64], index: 5, kind: output, shape index: {1}]
  %s6 = inlined_call_operand.vmem [shape: f32[2,64], index: 6, kind: output, shape index: {2}]
  %7 = xla_tuple %s4, %s5, %s6
  %s8 = sld [smem:[#allocation0]]
  $region69: #{encoder_cell_forward.1} parent=0
    _
  %s10 = ssub.s32 1, %s8
  %s11 = scalar_select 0, %s10, %s8
  loop: start=0, step=1, limit=4
  $region2: #{encoder_cell_forward.1} parent=0 // loop_pre_header
    _
  $region3: #{encoder_cell_forward.1} parent=0 // loop_header
    %s13 = sphi 0, %s17
    %p14 = scmp.ge.s32.totalorder %s13, 4
    %s23 = sphi 0, %s25
    %s26 = sphi 0, %s23
    %s27 = sphi 0, %s26
    %s43 = sphi 0, %s27
    %s47 = sphi 0, %s47
    %s49 = sphi 0, %s47
    %s50 = sphi 0, %s49
    %s64 = sphi 0, %s50
    %s68 = sphi 0, %s68
    %s70 = sphi 0, %s68
    %s71 = sphi 0, %s70
    %s85 = sphi 0, %s71
    %s89 = sphi 0, %s89
    %s91 = sphi 0, %s89
    %s92 = sphi 0, %s91
    %s106 = sphi 0, %s92
    %s112 = sphi 0, %s114
    %s115 = sphi 0, %s112
    %s116 = sphi 0, %s115
    %s132 = sphi 0, %s116
    %s136 = sphi 0, %s136
    %s138 = sphi 0, %s136
    %s139 = sphi 0, %s138
    %s153 = sphi 0, %s139
    %s157 = sphi 0, %s157
    %s159 = sphi 0, %s157
    %s160 = sphi 0, %s159
    %s174 = sphi 0, %s160
  $region4: #{encoder_cell_forward.1} parent=0 // loop_header_branch
    %16 = sbr.rel (%p14) target = $region8
  $region5: #{encoder_cell_forward.1} parent=0 // loop_body
    %s18 = ssub.s32 %s13, 1
    %s19 = ssub.s32 %s13, 2
    %s20 = sadd.s32 %s13, 1
    %s21 = ssub.s32 %s13, %s20
    %p22 = scmp.eq.s32.totalorder %s21, 0
    %s24 = sadd.s32 %s23, 1
    %s25 = scalar_select %p22, %s23, %s24
    %p28 = pneg %p22
    %p29 = scmp.eq.s32.totalorder %s13, 1
    %p30 = por %p28, %p29
    %p31 = scmp.ne.s32.totalorder %s23, %s26
    %p32 = scmp.eq.s32.totalorder %s13, 0
    %p33 = por %p31, %p32
    %p34 = scmp.ne.s32.totalorder %s23, %s26
    %p35 = scmp.eq.s32.totalorder %s18, 1
    %p36 = por %p34, %p35
    %p37 = scmp.ne.s32.totalorder %s26, %s27
    %p38 = scmp.eq.s32.totalorder %s18, 0
    %p39 = por %p37, %p38
    %p40 = scmp.ne.s32.totalorder %s26, %s27
    %p41 = scmp.eq.s32.totalorder %s19, 1
    %p42 = por %p40, %p41
    %p44 = scmp.ne.s32.totalorder %s27, %s43
    %p45 = scmp.eq.s32.totalorder %s19, 0
    %p46 = por %p44, %p45
    %s48 = sadd.s32 %s47, 1
    %p51 = scmp.eq.s32.totalorder %s13, 1
    %p52 = scmp.ne.s32.totalorder %s47, %s49
    %p53 = scmp.eq.s32.totalorder %s13, 0
    %p54 = por %p52, %p53
    %p55 = scmp.ne.s32.totalorder %s47, %s49
    %p56 = scmp.eq.s32.totalorder %s18, 1
    %p57 = por %p55, %p56
    %p58 = scmp.ne.s32.totalorder %s49, %s50
    %p59 = scmp.eq.s32.totalorder %s18, 0
    %p60 = por %p58, %p59
    %p61 = scmp.ne.s32.totalorder %s49, %s50
    %p62 = scmp.eq.s32.totalorder %s19, 1
    %p63 = por %p61, %p62
    %p65 = scmp.ne.s32.totalorder %s50, %s64
    %p66 = scmp.eq.s32.totalorder %s19, 0
    %p67 = por %p65, %p66
    %s69 = sadd.s32 %s68, 1
    %p72 = scmp.eq.s32.totalorder %s13, 1
    %p73 = scmp.ne.s32.totalorder %s68, %s70
    %p74 = scmp.eq.s32.totalorder %s13, 0
    %p75 = por %p73, %p74
    %p76 = scmp.ne.s32.totalorder %s68, %s70
    %p77 = scmp.eq.s32.totalorder %s18, 1
    %p78 = por %p76, %p77
    %p79 = scmp.ne.s32.totalorder %s70, %s71
    %p80 = scmp.eq.s32.totalorder %s18, 0
    %p81 = por %p79, %p80
    %p82 = scmp.ne.s32.totalorder %s70, %s71
    %p83 = scmp.eq.s32.totalorder %s19, 1
    %p84 = por %p82, %p83
    %p86 = scmp.ne.s32.totalorder %s71, %s85
    %p87 = scmp.eq.s32.totalorder %s19, 0
    %p88 = por %p86, %p87
    %s90 = sadd.s32 %s89, 1
    %p93 = scmp.eq.s32.totalorder %s13, 1
    %p94 = scmp.ne.s32.totalorder %s89, %s91
    %p95 = scmp.eq.s32.totalorder %s13, 0
    %p96 = por %p94, %p95
    %p97 = scmp.ne.s32.totalorder %s89, %s91
    %p98 = scmp.eq.s32.totalorder %s18, 1
    %p99 = por %p97, %p98
    %p100 = scmp.ne.s32.totalorder %s91, %s92
    %p101 = scmp.eq.s32.totalorder %s18, 0
    %p102 = por %p100, %p101
    %p103 = scmp.ne.s32.totalorder %s91, %s92
    %p104 = scmp.eq.s32.totalorder %s19, 1
    %p105 = por %p103, %p104
    %p107 = scmp.ne.s32.totalorder %s92, %s106
    %p108 = scmp.eq.s32.totalorder %s19, 0
    %p109 = por %p107, %p108
    %s110 = ssub.s32 %s13, %s20
    %p111 = scmp.eq.s32.totalorder %s110, 0
    %s113 = sadd.s32 %s112, 1
    %s114 = scalar_select %p111, %s112, %s113
    %p117 = pneg %p111
    %p118 = scmp.eq.s32.totalorder %s13, 1
    %p119 = por %p117, %p118
    %p120 = scmp.ne.s32.totalorder %s112, %s115
    %p121 = scmp.eq.s32.totalorder %s13, 0
    %p122 = por %p120, %p121
    %p123 = scmp.ne.s32.totalorder %s112, %s115
    %p124 = scmp.eq.s32.totalorder %s18, 1
    %p125 = por %p123, %p124
    %p126 = scmp.ne.s32.totalorder %s115, %s116
    %p127 = scmp.eq.s32.totalorder %s18, 0
    %p128 = por %p126, %p127
    %p129 = scmp.ne.s32.totalorder %s115, %s116
    %p130 = scmp.eq.s32.totalorder %s19, 1
    %p131 = por %p129, %p130
    %p133 = scmp.ne.s32.totalorder %s116, %s132
    %p134 = scmp.eq.s32.totalorder %s19, 0
    %p135 = por %p133, %p134
    %s137 = sadd.s32 %s136, 1
    %p140 = scmp.eq.s32.totalorder %s13, 1
    %p141 = scmp.ne.s32.totalorder %s136, %s138
    %p142 = scmp.eq.s32.totalorder %s13, 0
    %p143 = por %p141, %p142
    %p144 = scmp.ne.s32.totalorder %s136, %s138
    %p145 = scmp.eq.s32.totalorder %s18, 1
    %p146 = por %p144, %p145
    %p147 = scmp.ne.s32.totalorder %s138, %s139
    %p148 = scmp.eq.s32.totalorder %s18, 0
    %p149 = por %p147, %p148
    %p150 = scmp.ne.s32.totalorder %s138, %s139
    %p151 = scmp.eq.s32.totalorder %s19, 1
    %p152 = por %p150, %p151
    %p154 = scmp.ne.s32.totalorder %s139, %s153
    %p155 = scmp.eq.s32.totalorder %s19, 0
    %p156 = por %p154, %p155
    %s158 = sadd.s32 %s157, 1
    %p161 = scmp.eq.s32.totalorder %s13, 1
    %p162 = scmp.ne.s32.totalorder %s157, %s159
    %p163 = scmp.eq.s32.totalorder %s13, 0
    %p164 = por %p162, %p163
    %p165 = scmp.ne.s32.totalorder %s157, %s159
    %p166 = scmp.eq.s32.totalorder %s18, 1
    %p167 = por %p165, %p166
    %p168 = scmp.ne.s32.totalorder %s159, %s160
    %p169 = scmp.eq.s32.totalorder %s18, 0
    %p170 = por %p168, %p169
    %p171 = scmp.ne.s32.totalorder %s159, %s160
    %p172 = scmp.eq.s32.totalorder %s19, 1
    %p173 = por %p171, %p172
    %p175 = scmp.ne.s32.totalorder %s160, %s174
    %p176 = scmp.eq.s32.totalorder %s19, 0
    %p177 = por %p175, %p176
    %p178 = scmp.le.s32.totalorder 1, %s13
    %p179 = scmp.lt.s32.totalorder %s13, 3
    %p180 = pnand %p178, %p179
    %p181 = pneg %p180
    // Predicated region
    $region9: #{encoder_cell_forward.1} parent=5 // pred_check
      _
    $region10: #{encoder_cell_forward.1} parent=5 // pred_check_branch
      %183 = sbr.rel (%p180) target = $region12
    $region11: #{encoder_cell_forward.1} parent=5 // pred_region
      %s184 = ssub.s32 %s13, 1
      // Predicated region
      $region13: #{encoder_cell_forward.1} parent=11 // pred_check
        %p185 = pneg %p60
      $region14: #{encoder_cell_forward.1} parent=11 // pred_check_branch
        %187 = sbr.rel (%p185) target = $region16
      $region15: #{encoder_cell_forward.1} parent=11 // pred_region
        _
      $region16: #{encoder_cell_forward.1} parent=11 // pred_fallthru
        _
      // Predicated region
      $region17: #{encoder_cell_forward.1} parent=11 // pred_check
        %p188 = pneg %p81
      $region18: #{encoder_cell_forward.1} parent=11 // pred_check_branch
        %190 = sbr.rel (%p188) target = $region20
      $region19: #{encoder_cell_forward.1} parent=11 // pred_region
        _
      $region20: #{encoder_cell_forward.1} parent=11 // pred_fallthru
        _
      // Predicated region
      $region21: #{encoder_cell_forward.1} parent=11 // pred_check
        %p191 = pneg %p102
      $region22: #{encoder_cell_forward.1} parent=11 // pred_check_branch
        %193 = sbr.rel (%p191) target = $region24
      $region23: #{encoder_cell_forward.1} parent=11 // pred_region
        _
      $region24: #{encoder_cell_forward.1} parent=11 // pred_fallthru
        _
    $region12: #{encoder_cell_forward.1} parent=5 // pred_fallthru
      _
    %p194 = scmp.lt.s32.totalorder %s13, 2
    // Predicated region
    $region25: #{encoder_cell_forward.1} parent=5 // pred_check
      %p195 = pneg %p194
    $region26: #{encoder_cell_forward.1} parent=5 // pred_check_branch
      %197 = sbr.rel (%p195) target = $region28
    $region27: #{encoder_cell_forward.1} parent=5 // pred_region
      // Predicated region
      $region29: #{encoder_cell_forward.1} parent=27 // pred_check
        %p198 = pneg %p33
      $region30: #{encoder_cell_forward.1} parent=27 // pred_check_branch
        %200 = sbr.rel (%p198) target = $region32
      $region31: #{encoder_cell_forward.1} parent=27 // pred_region
        %s201 = smul.u32 4, %s13
        %p202 = scmp.lt.s32.totalorder %s201, 7
        %s203 = scalar_select %p202, %s201, 7
        %s204 = smul.addr %s203, 2
        %s205 = smul.addr %s204, 2
        %s206 = scalar_lea.vmem %s0, %s205
        %s207 = smul.u32 4, %s13
      $region32: #{encoder_cell_forward.1} parent=27 // pred_fallthru
        _
    $region28: #{encoder_cell_forward.1} parent=5 // pred_fallthru
      _
    %p208 = scmp.le.s32.totalorder 1, %s13
    %p209 = scmp.lt.s32.totalorder %s13, 3
    %p210 = pnand %p208, %p209
    %p211 = pneg %p210
    // Predicated region
    $region33: #{encoder_cell_forward.1} parent=5 // pred_check
      _
    $region34: #{encoder_cell_forward.1} parent=5 // pred_check_branch
      %213 = sbr.rel (%p210) target = $region36
    $region35: #{encoder_cell_forward.1} parent=5 // pred_region
      %s214 = ssub.s32 %s13, 1
      %s215 = smul.u32 4, %s18
      %p216 = scmp.lt.s32.totalorder %s215, 7
      %s217 = scalar_select %p216, %s215, 7
      %s218 = smul.addr %s217, 2
      %s219 = smul.addr %s218, 2
      %s220 = scalar_lea.vmem %s0, %s219
      %p221 = pneg %p39
      %p222 = pneg %p36
      %p223 = pneg %p60
      %p224 = pneg %p57
      %p225 = pneg %p81
      %p226 = pneg %p78
      %p227 = pneg %p102
      %p228 = pneg %p99
      %p229 = pneg %p128
      %p230 = pneg %p125
      %s231 = smul.u32 2, %s18
      %p232 = scmp.lt.s32.totalorder %s231, 3
      %s233 = scalar_select %p232, %s231, 3
      %s234 = smul.addr %s233, 2
      %s235 = scalar_lea.vmem %s4, %s234
      %p236 = pneg %p149
      %p237 = pneg %p146
      %p238 = pneg %p170
      %p239 = pneg %p167
      %s240 = smul.u32 4, %s18
      %p241 = scmp.lt.s32.totalorder %s240, 7
      %s242 = scalar_select %p241, %s240, 7
      %s243 = smul.addr %s242, 2
      %s244 = smul.addr %s243, 2
      %s245 = scalar_lea.vmem %s0, %s244
      %s246 = smul.u32 4, %s18
      %s247 = smul.u32 2, %s18
      %p248 = scmp.lt.s32.totalorder %s247, 3
      %s249 = scalar_select %p248, %s247, 3
      %s250 = smul.addr %s249, 2
      %s251 = scalar_lea.vmem %s4, %s250
      %s252 = smul.u32 2, %s18
      %p253 = scmp.eq.s32.totalorder %s18, 0
      // Predicated region
      $region37: #{encoder_cell_forward.1} parent=35 // pred_check
        %p254 = pneg %p253
      $region38: #{encoder_cell_forward.1} parent=35 // pred_check_branch
        %256 = sbr.rel (%p254) target = $region40
      $region39: #{encoder_cell_forward.1} parent=35 // pred_region
        %v257 = vld [vmem:[%s2] sm:$0x3]
        %vm258 = vcmask 517120
        %259 = vst.msk [vmem:[%s5] sm:$0x3] %vm258, %v257
        %v260 = vld [vmem:[%s3] sm:$0x3]
        %261 = vst.msk [vmem:[%s6] sm:$0x3] %vm258, %v260
      $region40: #{encoder_cell_forward.1} parent=35 // pred_fallthru
        _
      %v262 = vld [vmem:[%s1] sm:$0xff]
      %v263 = vld [vmem:[%s1 + $0x8] sm:$0xff]
      %v264 = vld [vmem:[%s1 + $0x10] sm:$0xff]
      %v265 = vld [vmem:[%s1 + $0x18] sm:$0xff]
      %v266 = vld [vmem:[%s1 + $0x20] sm:$0xff]
      %v267 = vld [vmem:[%s1 + $0x28] sm:$0xff]
      %v268 = vld [vmem:[%s1 + $0x30] sm:$0xff]
      %v269 = vld [vmem:[%s1 + $0x38] sm:$0xff]
      %v270 = vld [vmem:[%s1 + $0x40] sm:$0xff]
      %v271 = vld [vmem:[%s1 + $0x48] sm:$0xff]
      %v272 = vld [vmem:[%s1 + $0x50] sm:$0xff]
      %v273 = vld [vmem:[%s1 + $0x58] sm:$0xff]
      %v274 = vld [vmem:[%s1 + $0x60] sm:$0xff]
      %v275 = vld [vmem:[%s1 + $0x68] sm:$0xff]
      %v276 = vld [vmem:[%s1 + $0x70] sm:$0xff]
      %v277 = vld [vmem:[%s1 + $0x78] sm:$0xff]
      %v278 = vld [vmem:[%s5] sm:$0x3]
      %v279 = vld [vmem:[%s6] sm:$0x3]
      %v280 = vld [vmem:[%s245] sm:$0xf]
      %vm281 = vcmask 523264
      %v283 = vsel %vm281, %v278, 0
      %285 = vmatprep.subr.mxu0 %v263
      %286 = vmatpush1.msra.mxu0 %v262
      %287 = vmatprep.subr.mxu0 %v265
      %288 = vmatpush1.msra.mxu0 %v264
      %289 = vmatprep.subr.mxu0 %v267
      %290 = vmatpush1.msra.mxu0 %v266
      %291 = vmatprep.subr.mxu0 %v269
      %292 = vmatpush1.msra.mxu0 %v268
      %293 = vmatprep.subr.mxu0 %v271
      %294 = vmatpush1.msra.mxu0 %v270
      %295 = vmatprep.subr.mxu0 %v273
      %296 = vmatpush1.msra.mxu0 %v272
      %297 = vmatprep.subr.mxu0 %v275
      %298 = vmatpush1.msra.mxu0 %v274
      %299 = vmatprep.subr.mxu0 %v277
      %300 = vmatpush1.msra.mxu0 %v276
      %301 = vmatprep.subr.mxu0 0.0
      %302 = vmatpush1.msra.mxu0 0.0
      %303 = vmatprep.subr.mxu0 0.0
      %304 = vmatpush1.msra.mxu0 0.0
      %305 = vmatprep.subr.mxu0 0.0
      %306 = vmatpush1.msra.mxu0 0.0
      %307 = vmatprep.subr.mxu0 0.0
      %308 = vmatpush1.msra.mxu0 0.0
      %309 = vmatprep.subr.mxu0 0.0
      %310 = vmatpush1.msra.mxu0 0.0
      %311 = vmatprep.subr.mxu0 0.0
      %312 = vmatpush1.msra.mxu0 0.0
      %313 = vmatprep.subr.mxu0 0.0
      %314 = vmatpush1.msra.mxu0 0.0
      %315 = vmatprep.subr.mxu0 0.0
      %316 = vmatpush1.msra.mxu0 0.0
      %317 = vmatprep.subr.mxu0 0.0
      %318 = vmatpush1.msra.mxu0 0.0
      %319 = vmatprep.subr.mxu0 0.0
      %320 = vmatpush1.msra.mxu0 0.0
      %321 = vmatprep.subr.mxu0 0.0
      %322 = vmatpush1.msra.mxu0 0.0
      %323 = vmatprep.subr.mxu0 0.0
      %324 = vmatpush1.msra.mxu0 0.0
      %325 = vmatprep.subr.mxu0 0.0
      %326 = vmatpush1.msra.mxu0 0.0
      %327 = vmatprep.subr.mxu0 0.0
      %328 = vmatpush1.msra.mxu0 0.0
      %329 = vmatprep.subr.mxu0 0.0
      %330 = vmatpush1.msra.mxu0 0.0
      %331 = vmatprep.subr.mxu0 0.0
      %332 = vmatpush1.msra.mxu0 0.0
      %333 = vmatprep.subr.mxu0 0.0
      %334 = vmatpush1.msra.mxu0 0.0
      %335 = vmatprep.subr.mxu0 0.0
      %336 = vmatpush1.msra.mxu0 0.0
      %337 = vmatprep.subr.mxu0 0.0
      %338 = vmatpush1.msra.mxu0 0.0
      %339 = vmatprep.subr.mxu0 0.0
      %340 = vmatpush1.msra.mxu0 0.0
      %341 = vmatprep.subr.mxu0 0.0
      %342 = vmatpush1.msra.mxu0 0.0
      %343 = vmatprep.subr.mxu0 0.0
      %344 = vmatpush1.msra.mxu0 0.0
      %345 = vmatprep.subr.mxu0 0.0
      %346 = vmatpush1.msra.mxu0 0.0
      %347 = vmatprep.subr.mxu0 0.0
      %348 = vmatpush1.msra.mxu0 0.0
      %349 = vmatprep.mubr.f32.mxu0 0.0
      %350 = vmatmul.mubr.f32.gmra.mrb[0].mxu0 %v283
      %v351 = vpop.f32.mrb[0].mxu0
      %v352 = vadd.f32 0.0, %v351
      %v353 = vpop.f32.mrb[0].mxu0
      %v354 = vadd.f32 0.0, %v353
      %355 = vdwg.mxu0
      %v358 = vcombine.low %v352, %v354
      %v360 = vunpack.c.l.s4 1983009808
      %v361 = vunpack.c.0.s8 %v360
      %v362 = vlaneseq
      %v363 = vshrl.u32 %v362, 7
      %v364 = vsub.s32 %v361, %v363
      %v365 = vrot.slane %v358, %v364
      %v367 = vadd.f32 %v280, %v365
      %v368 = vxor.u32 %v367, 2147483648
      %v369 = vmul.f32 %v368, 1.442695
      %v370 = vpow.pop %v369
      %v371 = vadd.f32 %v370, 1.0
      %v372 = vrcp.pop %v371
      %v373 = vmul.f32 1.0, %v372
      %v375 = vrot.slane %v367, 2
      %v377 = vtanh.pop %v375
      %v380 = vunpack.c.l.s4 1983009808
      %v381 = vunpack.c.0.s8 %v380
      %v382 = vlaneseq
      %v383 = vshrl.u32 %v382, 7
      %v384 = vsub.s32 %v381, %v383
      %v385 = vrot.slane %v279, %v384
      %386 = vrot.lane.b32.xlu0 %v385, 64
      %v387 = vpop.permute.xlu0 %386
      %v389 = vmul.f32 %v373, %v387
      %v390 = vmul.f32 %v373, %v377
      %392 = vrot.lane.b32.xlu0 %v390, 64
      %v393 = vpop.permute.xlu0 %392
      %v395 = vadd.f32 %v389, %v393
      %v396 = vtanh.pop %v395
      %398 = vrot.lane.b32.xlu0 %v373, 64
      %v399 = vpop.permute.xlu0 %398
      %v400 = vrot.slane %v399, 2
      %403 = vrot.lane.b32.xlu0 %v396, 64
      %v404 = vpop.permute.xlu0 %403
      %v406 = vmul.f32 %v400, %v404
      %s407 = scalar_lea.vmem %s245, 4
      %v408 = vld [vmem:[%s407] sm:$0xf]
      %v410 = vsel %vm281, %v406, 0
      %412 = vmatprep.subr.mxu0 %v263
      %413 = vmatpush1.msra.mxu0 %v262
      %414 = vmatprep.subr.mxu0 %v265
      %415 = vmatpush1.msra.mxu0 %v264
      %416 = vmatprep.subr.mxu0 %v267
      %417 = vmatpush1.msra.mxu0 %v266
      %418 = vmatprep.subr.mxu0 %v269
      %419 = vmatpush1.msra.mxu0 %v268
      %420 = vmatprep.subr.mxu0 %v271
      %421 = vmatpush1.msra.mxu0 %v270
      %422 = vmatprep.subr.mxu0 %v273
      %423 = vmatpush1.msra.mxu0 %v272
      %424 = vmatprep.subr.mxu0 %v275
      %425 = vmatpush1.msra.mxu0 %v274
      %426 = vmatprep.subr.mxu0 %v277
      %427 = vmatpush1.msra.mxu0 %v276
      %428 = vmatprep.subr.mxu0 0.0
      %429 = vmatpush1.msra.mxu0 0.0
      %430 = vmatprep.subr.mxu0 0.0
      %431 = vmatpush1.msra.mxu0 0.0
      %432 = vmatprep.subr.mxu0 0.0
      %433 = vmatpush1.msra.mxu0 0.0
      %434 = vmatprep.subr.mxu0 0.0
      %435 = vmatpush1.msra.mxu0 0.0
      %436 = vmatprep.subr.mxu0 0.0
      %437 = vmatpush1.msra.mxu0 0.0
      %438 = vmatprep.subr.mxu0 0.0
      %439 = vmatpush1.msra.mxu0 0.0
      %440 = vmatprep.subr.mxu0 0.0
      %441 = vmatpush1.msra.mxu0 0.0
      %442 = vmatprep.subr.mxu0 0.0
      %443 = vmatpush1.msra.mxu0 0.0
      %444 = vmatprep.subr.mxu0 0.0
      %445 = vmatpush1.msra.mxu0 0.0
      %446 = vmatprep.subr.mxu0 0.0
      %447 = vmatpush1.msra.mxu0 0.0
      %448 = vmatprep.subr.mxu0 0.0
      %449 = vmatpush1.msra.mxu0 0.0
      %450 = vmatprep.subr.mxu0 0.0
      %451 = vmatpush1.msra.mxu0 0.0
      %452 = vmatprep.subr.mxu0 0.0
      %453 = vmatpush1.msra.mxu0 0.0
      %454 = vmatprep.subr.mxu0 0.0
      %455 = vmatpush1.msra.mxu0 0.0
      %456 = vmatprep.subr.mxu0 0.0
      %457 = vmatpush1.msra.mxu0 0.0
      %458 = vmatprep.subr.mxu0 0.0
      %459 = vmatpush1.msra.mxu0 0.0
      %460 = vmatprep.subr.mxu0 0.0
      %461 = vmatpush1.msra.mxu0 0.0
      %462 = vmatprep.subr.mxu0 0.0
      %463 = vmatpush1.msra.mxu0 0.0
      %464 = vmatprep.subr.mxu0 0.0
      %465 = vmatpush1.msra.mxu0 0.0
      %466 = vmatprep.subr.mxu0 0.0
      %467 = vmatpush1.msra.mxu0 0.0
      %468 = vmatprep.subr.mxu0 0.0
      %469 = vmatpush1.msra.mxu0 0.0
      %470 = vmatprep.subr.mxu0 0.0
      %471 = vmatpush1.msra.mxu0 0.0
      %472 = vmatprep.subr.mxu0 0.0
      %473 = vmatpush1.msra.mxu0 0.0
      %474 = vmatprep.subr.mxu0 0.0
      %475 = vmatpush1.msra.mxu0 0.0
      %476 = vmatprep.mubr.f32.mxu0 0.0
      %477 = vmatmul.mubr.f32.gmra.mrb[0].mxu0 %v410
      %v478 = vpop.f32.mrb[0].mxu0
      %v479 = vadd.f32 0.0, %v478
      %v480 = vpop.f32.mrb[0].mxu0
      %v481 = vadd.f32 0.0, %v480
      %482 = vdwg.mxu0
      %v485 = vcombine.low %v479, %v481
      %v487 = vunpack.c.l.s4 1983009808
      %v488 = vunpack.c.0.s8 %v487
      %v489 = vlaneseq
      %v490 = vshrl.u32 %v489, 7
      %v491 = vsub.s32 %v488, %v490
      %v492 = vrot.slane %v485, %v491
      %v494 = vadd.f32 %v408, %v492
      %v495 = vxor.u32 %v494, 2147483648
      %v496 = vmul.f32 %v495, 1.442695
      %v497 = vpow.pop %v496
      %v498 = vadd.f32 %v497, 1.0
      %v499 = vrcp.pop %v498
      %v500 = vmul.f32 1.0, %v499
      %v502 = vrot.slane %v494, 2
      %v504 = vtanh.pop %v502
      %v505 = vmul.f32 %v500, %v395
      %v506 = vmul.f32 %v500, %v504
      %508 = vrot.lane.b32.xlu0 %v506, 64
      %v509 = vpop.permute.xlu0 %508
      %v511 = vadd.f32 %v505, %v509
      %v512 = vtanh.pop %v511
      %514 = vrot.lane.b32.xlu0 %v500, 64
      %v515 = vpop.permute.xlu0 %514
      %v516 = vrot.slane %v515, 2
      %519 = vrot.lane.b32.xlu0 %v512, 64
      %v520 = vpop.permute.xlu0 %519
      %v522 = vmul.f32 %v516, %v520
      %s523 = scalar_lea.vmem %s245, 8
      %v524 = vld [vmem:[%s523] sm:$0xf]
      %v526 = vsel %vm281, %v522, 0
      %528 = vmatprep.subr.mxu0 %v263
      %529 = vmatpush1.msra.mxu0 %v262
      %530 = vmatprep.subr.mxu0 %v265
      %531 = vmatpush1.msra.mxu0 %v264
      %532 = vmatprep.subr.mxu0 %v267
      %533 = vmatpush1.msra.mxu0 %v266
      %534 = vmatprep.subr.mxu0 %v269
      %535 = vmatpush1.msra.mxu0 %v268
      %536 = vmatprep.subr.mxu0 %v271
      %537 = vmatpush1.msra.mxu0 %v270
      %538 = vmatprep.subr.mxu0 %v273
      %539 = vmatpush1.msra.mxu0 %v272
      %540 = vmatprep.subr.mxu0 %v275
      %541 = vmatpush1.msra.mxu0 %v274
      %542 = vmatprep.subr.mxu0 %v277
      %543 = vmatpush1.msra.mxu0 %v276
      %544 = vmatprep.subr.mxu0 0.0
      %545 = vmatpush1.msra.mxu0 0.0
      %546 = vmatprep.subr.mxu0 0.0
      %547 = vmatpush1.msra.mxu0 0.0
      %548 = vmatprep.subr.mxu0 0.0
      %549 = vmatpush1.msra.mxu0 0.0
      %550 = vmatprep.subr.mxu0 0.0
      %551 = vmatpush1.msra.mxu0 0.0
      %552 = vmatprep.subr.mxu0 0.0
      %553 = vmatpush1.msra.mxu0 0.0
      %554 = vmatprep.subr.mxu0 0.0
      %555 = vmatpush1.msra.mxu0 0.0
      %556 = vmatprep.subr.mxu0 0.0
      %557 = vmatpush1.msra.mxu0 0.0
      %558 = vmatprep.subr.mxu0 0.0
      %559 = vmatpush1.msra.mxu0 0.0
      %560 = vmatprep.subr.mxu0 0.0
      %561 = vmatpush1.msra.mxu0 0.0
      %562 = vmatprep.subr.mxu0 0.0
      %563 = vmatpush1.msra.mxu0 0.0
      %564 = vmatprep.subr.mxu0 0.0
      %565 = vmatpush1.msra.mxu0 0.0
      %566 = vmatprep.subr.mxu0 0.0
      %567 = vmatpush1.msra.mxu0 0.0
      %568 = vmatprep.subr.mxu0 0.0
      %569 = vmatpush1.msra.mxu0 0.0
      %570 = vmatprep.subr.mxu0 0.0
      %571 = vmatpush1.msra.mxu0 0.0
      %572 = vmatprep.subr.mxu0 0.0
      %573 = vmatpush1.msra.mxu0 0.0
      %574 = vmatprep.subr.mxu0 0.0
      %575 = vmatpush1.msra.mxu0 0.0
      %576 = vmatprep.subr.mxu0 0.0
      %577 = vmatpush1.msra.mxu0 0.0
      %578 = vmatprep.subr.mxu0 0.0
      %579 = vmatpush1.msra.mxu0 0.0
      %580 = vmatprep.subr.mxu0 0.0
      %581 = vmatpush1.msra.mxu0 0.0
      %582 = vmatprep.subr.mxu0 0.0
      %583 = vmatpush1.msra.mxu0 0.0
      %584 = vmatprep.subr.mxu0 0.0
      %585 = vmatpush1.msra.mxu0 0.0
      %586 = vmatprep.subr.mxu0 0.0
      %587 = vmatpush1.msra.mxu0 0.0
      %588 = vmatprep.subr.mxu0 0.0
      %589 = vmatpush1.msra.mxu0 0.0
      %590 = vmatprep.subr.mxu0 0.0
      %591 = vmatpush1.msra.mxu0 0.0
      %592 = vmatprep.mubr.f32.mxu0 0.0
      %593 = vmatmul.mubr.f32.gmra.mrb[0].mxu0 %v526
      %v594 = vpop.f32.mrb[0].mxu0
      %v595 = vadd.f32 0.0, %v594
      %v596 = vpop.f32.mrb[0].mxu0
      %v597 = vadd.f32 0.0, %v596
      %598 = vdwg.mxu0
      %v601 = vcombine.low %v595, %v597
      %v603 = vunpack.c.l.s4 1983009808
      %v604 = vunpack.c.0.s8 %v603
      %v605 = vlaneseq
      %v606 = vshrl.u32 %v605, 7
      %v607 = vsub.s32 %v604, %v606
      %v608 = vrot.slane %v601, %v607
      %v610 = vadd.f32 %v524, %v608
      %v611 = vxor.u32 %v610, 2147483648
      %v612 = vmul.f32 %v611, 1.442695
      %v613 = vpow.pop %v612
      %v614 = vadd.f32 %v613, 1.0
      %v615 = vrcp.pop %v614
      %v616 = vmul.f32 1.0, %v615
      %v618 = vrot.slane %v610, 2
      %v620 = vtanh.pop %v618
      %v621 = vmul.f32 %v616, %v511
      %v622 = vmul.f32 %v616, %v620
      %624 = vrot.lane.b32.xlu0 %v622, 64
      %v625 = vpop.permute.xlu0 %624
      %v627 = vadd.f32 %v621, %v625
      %v628 = vtanh.pop %v627
      %630 = vrot.lane.b32.xlu0 %v616, 64
      %v631 = vpop.permute.xlu0 %630
      %v632 = vrot.slane %v631, 2
      %635 = vrot.lane.b32.xlu0 %v628, 64
      %v636 = vpop.permute.xlu0 %635
      %v638 = vmul.f32 %v632, %v636
      %s639 = scalar_lea.vmem %s245, 12
      %v640 = vld [vmem:[%s639] sm:$0xf]
      %v642 = vsel %vm281, %v638, 0
      %644 = vmatprep.subr.mxu0 %v263
      %645 = vmatpush1.msra.mxu0 %v262
      %646 = vmatprep.subr.mxu0 %v265
      %647 = vmatpush1.msra.mxu0 %v264
      %648 = vmatprep.subr.mxu0 %v267
      %649 = vmatpush1.msra.mxu0 %v266
      %650 = vmatprep.subr.mxu0 %v269
      %651 = vmatpush1.msra.mxu0 %v268
      %652 = vmatprep.subr.mxu0 %v271
      %653 = vmatpush1.msra.mxu0 %v270
      %654 = vmatprep.subr.mxu0 %v273
      %655 = vmatpush1.msra.mxu0 %v272
      %656 = vmatprep.subr.mxu0 %v275
      %657 = vmatpush1.msra.mxu0 %v274
      %658 = vmatprep.subr.mxu0 %v277
      %659 = vmatpush1.msra.mxu0 %v276
      %660 = vmatprep.subr.mxu0 0.0
      %661 = vmatpush1.msra.mxu0 0.0
      %662 = vmatprep.subr.mxu0 0.0
      %663 = vmatpush1.msra.mxu0 0.0
      %664 = vmatprep.subr.mxu0 0.0
      %665 = vmatpush1.msra.mxu0 0.0
      %666 = vmatprep.subr.mxu0 0.0
      %667 = vmatpush1.msra.mxu0 0.0
      %668 = vmatprep.subr.mxu0 0.0
      %669 = vmatpush1.msra.mxu0 0.0
      %670 = vmatprep.subr.mxu0 0.0
      %671 = vmatpush1.msra.mxu0 0.0
      %672 = vmatprep.subr.mxu0 0.0
      %673 = vmatpush1.msra.mxu0 0.0
      %674 = vmatprep.subr.mxu0 0.0
      %675 = vmatpush1.msra.mxu0 0.0
      %676 = vmatprep.subr.mxu0 0.0
      %677 = vmatpush1.msra.mxu0 0.0
      %678 = vmatprep.subr.mxu0 0.0
      %679 = vmatpush1.msra.mxu0 0.0
      %680 = vmatprep.subr.mxu0 0.0
      %681 = vmatpush1.msra.mxu0 0.0
      %682 = vmatprep.subr.mxu0 0.0
      %683 = vmatpush1.msra.mxu0 0.0
      %684 = vmatprep.subr.mxu0 0.0
      %685 = vmatpush1.msra.mxu0 0.0
      %686 = vmatprep.subr.mxu0 0.0
      %687 = vmatpush1.msra.mxu0 0.0
      %688 = vmatprep.subr.mxu0 0.0
      %689 = vmatpush1.msra.mxu0 0.0
      %690 = vmatprep.subr.mxu0 0.0
      %691 = vmatpush1.msra.mxu0 0.0
      %692 = vmatprep.subr.mxu0 0.0
      %693 = vmatpush1.msra.mxu0 0.0
      %694 = vmatprep.subr.mxu0 0.0
      %695 = vmatpush1.msra.mxu0 0.0
      %696 = vmatprep.subr.mxu0 0.0
      %697 = vmatpush1.msra.mxu0 0.0
      %698 = vmatprep.subr.mxu0 0.0
      %699 = vmatpush1.msra.mxu0 0.0
      %700 = vmatprep.subr.mxu0 0.0
      %701 = vmatpush1.msra.mxu0 0.0
      %702 = vmatprep.subr.mxu0 0.0
      %703 = vmatpush1.msra.mxu0 0.0
      %704 = vmatprep.subr.mxu0 0.0
      %705 = vmatpush1.msra.mxu0 0.0
      %706 = vmatprep.subr.mxu0 0.0
      %707 = vmatpush1.msra.mxu0 0.0
      %708 = vmatprep.mubr.f32.mxu0 0.0
      %709 = vmatmul.mubr.f32.gmra.mrb[0].mxu0 %v642
      %v710 = vpop.f32.mrb[0].mxu0
      %v711 = vadd.f32 0.0, %v710
      %v712 = vpop.f32.mrb[0].mxu0
      %v713 = vadd.f32 0.0, %v712
      %714 = vdwg.mxu0
      %v717 = vcombine.low %v711, %v713
      %v719 = vunpack.c.l.s4 1983009808
      %v720 = vunpack.c.0.s8 %v719
      %v721 = vlaneseq
      %v722 = vshrl.u32 %v721, 7
      %v723 = vsub.s32 %v720, %v722
      %v724 = vrot.slane %v717, %v723
      %v726 = vadd.f32 %v640, %v724
      %v727 = vxor.u32 %v726, 2147483648
      %v728 = vmul.f32 %v727, 1.442695
      %v729 = vpow.pop %v728
      %v730 = vadd.f32 %v729, 1.0
      %v731 = vrcp.pop %v730
      %v732 = vmul.f32 1.0, %v731
      %v734 = vrot.slane %v726, 2
      %v736 = vtanh.pop %v734
      %v737 = vmul.f32 %v732, %v627
      %v738 = vmul.f32 %v732, %v736
      %740 = vrot.lane.b32.xlu0 %v738, 64
      %v741 = vpop.permute.xlu0 %740
      %v743 = vadd.f32 %v737, %v741
      %v744 = vtanh.pop %v743
      %746 = vrot.lane.b32.xlu0 %v732, 64
      %v747 = vpop.permute.xlu0 %746
      %v748 = vrot.slane %v747, 2
      %751 = vrot.lane.b32.xlu0 %v744, 64
      %v752 = vpop.permute.xlu0 %751
      %v754 = vmul.f32 %v748, %v752
      %v756 = vunpack.c.l.s4 1983009808
      %v757 = vunpack.c.0.s8 %v756
      %v758 = vlaneseq
      %v759 = vshrl.u32 %v758, 7
      %v760 = vsub.s32 %v757, %v759
      %v761 = vrot.slane %v522, %v760
      %762 = vrot.lane.b32.xlu0 %v761, 64
      %v763 = vpop.permute.xlu0 %762
      %v767 = vunpack.c.l.s4 1983009808
      %v768 = vunpack.c.0.s8 %v767
      %v769 = vlaneseq
      %v770 = vshrl.u32 %v769, 7
      %v771 = vsub.s32 %v768, %v770
      %v772 = vrot.slane %v754, %v771
      %773 = vrot.lane.b32.xlu0 %v772, 64
      %v774 = vpop.permute.xlu0 %773
      %v776 = vsel %vm281, %v406, %v763
      %v777 = vsel %vm281, %v638, %v774
      %v780 = vcombine.low %v776, %v777
      %v782 = vunpack.c.l.s4 1983009808
      %v783 = vunpack.c.0.s8 %v782
      %v784 = vlaneseq
      %v785 = vshrl.u32 %v784, 7
      %v786 = vsub.s32 %v783, %v785
      %v787 = vrot.slane %v780, %v786
      %789 = vst [vmem:[%s251] sm:$0xf] %v787
      %vm790 = vcmask 517120
      %791 = vst.msk [vmem:[%s5] sm:$0x3] %vm790, %v754
      %v794 = vunpack.c.l.s4 1983009808
      %v795 = vunpack.c.0.s8 %v794
      %v796 = vlaneseq
      %v797 = vshrl.u32 %v796, 7
      %v798 = vsub.s32 %v795, %v797
      %v799 = vrot.slane %v743, %v798
      %800 = vrot.lane.b32.xlu0 %v799, 64
      %v801 = vpop.permute.xlu0 %800
      %803 = vst.msk [vmem:[%s6] sm:$0x3] %vm790, %v801
      %s804 = smul.u32 2, %s18
      %p805 = scmp.lt.s32.totalorder %s804, 3
      %s806 = scalar_select %p805, %s804, 3
      %s807 = smul.addr %s806, 2
      %s808 = scalar_lea.vmem %s4, %s807
      // Predicated region
      $region41: #{encoder_cell_forward.1} parent=35 // pred_check
        %p809 = pneg %p125
      $region42: #{encoder_cell_forward.1} parent=35 // pred_check_branch
        %811 = sbr.rel (%p809) target = $region44
      $region43: #{encoder_cell_forward.1} parent=35 // pred_region
        %s812 = smul.u32 2, %s18
      $region44: #{encoder_cell_forward.1} parent=35 // pred_fallthru
        _
      // Predicated region
      $region45: #{encoder_cell_forward.1} parent=35 // pred_check
        %p813 = pneg %p146
      $region46: #{encoder_cell_forward.1} parent=35 // pred_check_branch
        %815 = sbr.rel (%p813) target = $region48
      $region47: #{encoder_cell_forward.1} parent=35 // pred_region
        _
      $region48: #{encoder_cell_forward.1} parent=35 // pred_fallthru
        _
      // Predicated region
      $region49: #{encoder_cell_forward.1} parent=35 // pred_check
        %p816 = pneg %p167
      $region50: #{encoder_cell_forward.1} parent=35 // pred_check_branch
        %818 = sbr.rel (%p816) target = $region52
      $region51: #{encoder_cell_forward.1} parent=35 // pred_region
        _
      $region52: #{encoder_cell_forward.1} parent=35 // pred_fallthru
        _
      // Predicated region
      $region53: #{encoder_cell_forward.1} parent=35 // pred_check
        %p819 = pneg %p146
      $region54: #{encoder_cell_forward.1} parent=35 // pred_check_branch
        %821 = sbr.rel (%p819) target = $region56
      $region55: #{encoder_cell_forward.1} parent=35 // pred_region
        _
      $region56: #{encoder_cell_forward.1} parent=35 // pred_fallthru
        _
      // Predicated region
      $region57: #{encoder_cell_forward.1} parent=35 // pred_check
        %p822 = pneg %p167
      $region58: #{encoder_cell_forward.1} parent=35 // pred_check_branch
        %824 = sbr.rel (%p822) target = $region60
      $region59: #{encoder_cell_forward.1} parent=35 // pred_region
        _
      $region60: #{encoder_cell_forward.1} parent=35 // pred_fallthru
        _
    $region36: #{encoder_cell_forward.1} parent=5 // pred_fallthru
      _
    %p825 = scmp.le.s32.totalorder 2, %s13
    // Predicated region
    $region61: #{encoder_cell_forward.1} parent=5 // pred_check
      %p826 = pneg %p825
    $region62: #{encoder_cell_forward.1} parent=5 // pred_check_branch
      %828 = sbr.rel (%p826) target = $region64
    $region63: #{encoder_cell_forward.1} parent=5 // pred_region
      %s829 = ssub.s32 %s13, 2
      // Predicated region
      $region65: #{encoder_cell_forward.1} parent=63 // pred_check
        %p830 = pneg %p131
      $region66: #{encoder_cell_forward.1} parent=63 // pred_check_branch
        %832 = sbr.rel (%p830) target = $region68
      $region67: #{encoder_cell_forward.1} parent=63 // pred_region
        %s833 = smul.u32 2, %s19
        %p834 = scmp.lt.s32.totalorder %s833, 3
        %s835 = scalar_select %p834, %s833, 3
        %s836 = smul.addr %s835, 2
        %s837 = scalar_lea.vmem %s4, %s836
      $region68: #{encoder_cell_forward.1} parent=63 // pred_fallthru
        _
    $region64: #{encoder_cell_forward.1} parent=5 // pred_fallthru
      _
  $region6: #{encoder_cell_forward.1} parent=0 // loop_footer
    %s17 = sadd.s32 1, %s13
  $region7: #{encoder_cell_forward.1} parent=0 // loop_footer_branch
    %12 = sbr.rel target = $region3
  $region8: #{encoder_cell_forward.1} parent=0 // loop_exit
    _

</llo_original>
